<compile_context>
chip_gen: v7x
topology: tpu7x:2x2x1
jax: 0.10.0
libtpu: 0.0.40
codegen_flags: <defaults>
</compile_context>

<pallas_src>
import jax
import jax.numpy as jnp
import numpy as np
from jax.experimental import pallas as pl
from jax.experimental.pallas import tpu as pltpu

# --- module hyperparameters (from Networks.py) -------------------------------
CONV_OUT4 = 128                    # feature dim after conv stack + global max pool
JNT_DIM = 5
LINEAR_OUT = 512
SMALL_DIM = 2 * JNT_DIM + 3        # 13  (jnt_pos | jnt_goal | weights)
SMALL_PAD = 16                     # pad K of the merged small matmul
OUT_PAD = 128                      # lane-dense padded output width (real = JNT_DIM)
TAU_MAX = 1.0                      # module-level global `tau_max` (not shown in snippet)
LN_EPS = 1e-5

_SELU_ALPHA = 1.6732632423543772
_SELU_SCALE = 1.0507009873554805


def _selu(x):
    return _SELU_SCALE * jnp.where(x > 0, x, _SELU_ALPHA * (jnp.exp(x) - 1.0))


def _layernorm(x, gamma, beta):
    mu = jnp.mean(x, axis=-1, keepdims=True)
    var = jnp.mean((x - mu) * (x - mu), axis=-1, keepdims=True)
    return (x - mu) * jax.lax.rsqrt(var + LN_EPS) * gamma + beta


# --- Pallas kernel ------------------------------------------------------------
def actor_head_kernel(
    x_ref, s_ref,                    # activations: pooled features [B,128], small inputs [B,16]
    g1_ref, be1_ref,                 # LayerNorm(128) params
    w1s_ref, w1x_ref, b1_ref,        # Linear(141,512): stacked small weight [16,512], x weight [128,512]
    g2_ref, be2_ref,                 # LayerNorm(512) params
    w2_ref, b2_ref,                  # Linear(512,5) padded to (512,128)/(1,128)
    out_ref,                         # [B,128] (first 5 lanes are the real output)
):
    # norm: LayerNorm(conv_out4) + SELU on pooled conv features (f32)
    x = _selu(_layernorm(x_ref[...], g1_ref[...], be1_ref[...]))
    # dropout1: identity in eval mode

    # linear[0]: Linear(141, 512); concat folded into 2 bf16 matmuls, f32 accumulation
    h = (
        jnp.dot(s_ref[...], w1s_ref[...], preferred_element_type=jnp.float32)
        + jnp.dot(x.astype(jnp.bfloat16), w1x_ref[...],
                  preferred_element_type=jnp.float32)
        + b1_ref[...]
    )
    # linear[1:]: LayerNorm(512) + SELU (f32)
    h = _selu(_layernorm(h, g2_ref[...], be2_ref[...]))
    # dropout2: identity in eval mode

    # out: Linear(512, jnt_dim) + Tanh, scaled by tau_max.  Lane-padded to 128 wide
    # so the final store is an unmasked lane-dense vst.
    y = jnp.dot(h.astype(jnp.bfloat16), w2_ref[...],
                preferred_element_type=jnp.float32) + b2_ref[...]
    out_ref[...] = jnp.tanh(y) * TAU_MAX


def actor_head(x, jnt_pos, jnt_goal, weights, params):
    B = x.shape[0]
    b_pad = max(8, ((B + 7) // 8) * 8)  # round batch up to f32 sublane multiple

    # merge + pad the three tiny inputs into one [B_pad, 16] operand
    small = jnp.concatenate([jnt_pos, jnt_goal, weights], axis=1)          # [B, 13]
    small = jnp.pad(small, ((0, b_pad - B), (0, SMALL_PAD - SMALL_DIM)))
    small = small.astype(jnp.bfloat16)
    x_p = jnp.pad(x, ((0, b_pad - B), (0, 0)))                             # [B_pad, 128]

    inputs = (
        x_p, small,
        params["ln1_g"], params["ln1_b"],
        params["w1_small"], params["w1_x"], params["b1"],
        params["ln2_g"], params["ln2_b"],
        params["w2"], params["b2"],
    )
    vmem_spec = pl.BlockSpec(memory_space=pltpu.MemorySpace.VMEM)

    out = pl.pallas_call(
        actor_head_kernel,
        out_shape=jax.ShapeDtypeStruct((b_pad, OUT_PAD), jnp.float32),
        in_specs=[vmem_spec] * len(inputs),
        out_specs=vmem_spec,
    )(*inputs)
    return out[:B, :JNT_DIM]


# --- pure-JAX reference (matches the kernel's bf16-matmul / f32-accumulate path) ----
def actor_head_ref(x, jnt_pos, jnt_goal, weights, params):
    xs = _selu(_layernorm(x, params["ln1_g"], params["ln1_b"]))
    cat = jnp.concatenate([jnt_pos, jnt_goal, weights, xs], axis=1)        # [B, 141]
    w1 = jnp.concatenate([params["w1_small"][:SMALL_DIM], params["w1_x"]], axis=0)
    h = (
        jnp.dot(cat.astype(jnp.bfloat16), w1, preferred_element_type=jnp.float32)
        + params["b1"]
    )
    h = _selu(_layernorm(h, params["ln2_g"], params["ln2_b"]))
    y = (
        jnp.dot(h.astype(jnp.bfloat16), params["w2"],
                preferred_element_type=jnp.float32)
        + params["b2"]
    )
    return (jnp.tanh(y) * TAU_MAX)[:, :JNT_DIM]


def make_params(key):
    ks = jax.random.split(key, 4)

    def init(k, shape, fan_in):
        return (jax.random.normal(k, shape, jnp.float32) / np.sqrt(fan_in)).astype(jnp.float32)

    w1 = init(ks[0], (SMALL_DIM + CONV_OUT4, LINEAR_OUT), SMALL_DIM + CONV_OUT4)  # [141, 512]
    w2 = init(ks[1], (LINEAR_OUT, JNT_DIM), LINEAR_OUT)                            # [512, 5]
    b1 = init(ks[2], (1, LINEAR_OUT), SMALL_DIM + CONV_OUT4)
    b2 = init(ks[3], (1, JNT_DIM), LINEAR_OUT)

    # stacked small-input weight [16, 512]: rows 0:13 = [pos(5); goal(5); weights(3)], rows 13:16 zero
    w1_small = jnp.zeros((SMALL_PAD, LINEAR_OUT), jnp.float32).at[:SMALL_DIM].set(w1[:SMALL_DIM])
    # x-branch weight [128, 512]
    w1_x = w1[SMALL_DIM:]
    # lane-padded output weight/bias (real columns 0:5, rest zero)
    w2_pad = jnp.zeros((LINEAR_OUT, OUT_PAD), jnp.float32).at[:, :JNT_DIM].set(w2)
    b2_pad = jnp.zeros((1, OUT_PAD), jnp.float32).at[:, :JNT_DIM].set(b2)

    return {
        "ln1_g": jnp.ones((1, CONV_OUT4), jnp.float32),
        "ln1_b": jnp.zeros((1, CONV_OUT4), jnp.float32),
        "w1_small": w1_small.astype(jnp.bfloat16),
        "w1_x": w1_x.astype(jnp.bfloat16),
        "b1": b1,
        "ln2_g": jnp.ones((1, LINEAR_OUT), jnp.float32),
        "ln2_b": jnp.zeros((1, LINEAR_OUT), jnp.float32),
        "w2": w2_pad.astype(jnp.bfloat16),
        "b2": b2_pad,
    }


if __name__ == "__main__":
    key = jax.random.PRNGKey(0)
    kx, kp, kg, kw, kparams = jax.random.split(key, 5)

    B = 4
    x = jax.random.normal(kx, (B, CONV_OUT4), jnp.float32)        # pooled conv features
    jnt_pos = jax.random.normal(kp, (B, JNT_DIM), jnp.float32)
    jnt_goal = jax.random.normal(kg, (B, JNT_DIM), jnp.float32)
    weights = jax.random.normal(kw, (B, 3), jnp.float32)
    params = make_params(kparams)

    out = actor_head(x, jnt_pos, jnt_goal, weights, params)
    out = jax.block_until_ready(out)

    ref = actor_head_ref(x, jnt_pos, jnt_goal, weights, params)
    np.testing.assert_allclose(np.asarray(out), np.asarray(ref), rtol=1e-2, atol=1e-2)

    print("KERNEL_OK")
</pallas_src>

<mosaic_0001>
module attributes {stable_mosaic.version = 11 : i64} {
  func.func @actor_head_kernel(%arg0: memref<8x128xf32, #tpu.memory_space<vmem>>, %arg1: memref<8x16xbf16, #tpu.memory_space<vmem>>, %arg2: memref<1x128xf32, #tpu.memory_space<vmem>>, %arg3: memref<1x128xf32, #tpu.memory_space<vmem>>, %arg4: memref<16x512xbf16, #tpu.memory_space<vmem>>, %arg5: memref<128x512xbf16, #tpu.memory_space<vmem>>, %arg6: memref<1x512xf32, #tpu.memory_space<vmem>>, %arg7: memref<1x512xf32, #tpu.memory_space<vmem>>, %arg8: memref<1x512xf32, #tpu.memory_space<vmem>>, %arg9: memref<512x128xbf16, #tpu.memory_space<vmem>>, %arg10: memref<1x128xf32, #tpu.memory_space<vmem>>, %arg11: memref<8x128xf32, #tpu.memory_space<vmem>>) attributes {dimension_semantics = [], scalar_prefetch = 0 : i64, scratch_operands = 0 : i64, tpu.core_type = #tpu.core_type<tc>} {
    %c0 = arith.constant 0 : index
    %c0_0 = arith.constant 0 : index
    %0 = vector.load %arg0[%c0, %c0_0] : memref<8x128xf32, #tpu.memory_space<vmem>>, vector<8x128xf32>
    %c0_1 = arith.constant 0 : index
    %c0_2 = arith.constant 0 : index
    %1 = vector.load %arg2[%c0_1, %c0_2] : memref<1x128xf32, #tpu.memory_space<vmem>>, vector<1x128xf32>
    %c0_3 = arith.constant 0 : index
    %c0_4 = arith.constant 0 : index
    %2 = vector.load %arg3[%c0_3, %c0_4] : memref<1x128xf32, #tpu.memory_space<vmem>>, vector<1x128xf32>
    %cst = arith.constant dense<0.000000e+00> : vector<8xf32>
    %3 = vector.multi_reduction <add>, %0, %cst [1] : vector<8x128xf32> to vector<8xf32>
    %4 = vector.shape_cast %3 : vector<8xf32> to vector<8x1xf32>
    %cst_5 = arith.constant 1.280000e+02 : f32
    %5 = vector.broadcast %cst_5 : f32 to vector<8x1xf32>
    %6 = arith.divf %4, %5 : vector<8x1xf32>
    %7 = vector.broadcast %6 : vector<8x1xf32> to vector<8x128xf32>
    %8 = arith.subf %0, %7 : vector<8x128xf32>
    %9 = vector.broadcast %6 : vector<8x1xf32> to vector<8x128xf32>
    %10 = arith.subf %0, %9 : vector<8x128xf32>
    %11 = arith.mulf %8, %10 : vector<8x128xf32>
    %cst_6 = arith.constant dense<0.000000e+00> : vector<8xf32>
    %12 = vector.multi_reduction <add>, %11, %cst_6 [1] : vector<8x128xf32> to vector<8xf32>
    %13 = vector.shape_cast %12 : vector<8xf32> to vector<8x1xf32>
    %cst_7 = arith.constant 1.280000e+02 : f32
    %14 = vector.broadcast %cst_7 : f32 to vector<8x1xf32>
    %15 = arith.divf %13, %14 : vector<8x1xf32>
    %16 = vector.broadcast %6 : vector<8x1xf32> to vector<8x128xf32>
    %17 = arith.subf %0, %16 : vector<8x128xf32>
    %cst_8 = arith.constant 9.99999974E-6 : f32
    %18 = vector.broadcast %cst_8 : f32 to vector<8x1xf32>
    %19 = arith.addf %15, %18 : vector<8x1xf32>
    %20 = math.rsqrt %19 : vector<8x1xf32>
    %21 = vector.broadcast %20 : vector<8x1xf32> to vector<8x128xf32>
    %22 = arith.mulf %17, %21 : vector<8x128xf32>
    %23 = vector.broadcast %1 : vector<1x128xf32> to vector<8x128xf32>
    %24 = arith.mulf %22, %23 : vector<8x128xf32>
    %25 = vector.broadcast %2 : vector<1x128xf32> to vector<8x128xf32>
    %26 = arith.addf %24, %25 : vector<8x128xf32>
    %cst_9 = arith.constant 0.000000e+00 : f32
    %27 = vector.broadcast %cst_9 : f32 to vector<8x128xf32>
    %28 = arith.cmpf ogt, %26, %27 : vector<8x128xf32>
    %29 = math.exp %26 : vector<8x128xf32>
    %cst_10 = arith.constant 1.000000e+00 : f32
    %30 = vector.broadcast %cst_10 : f32 to vector<8x128xf32>
    %31 = arith.subf %29, %30 : vector<8x128xf32>
    %cst_11 = arith.constant 1.67326319 : f32
    %32 = vector.broadcast %cst_11 : f32 to vector<8x128xf32>
    %33 = arith.mulf %32, %31 : vector<8x128xf32>
    %34 = arith.select %28, %26, %33 : vector<8x128xi1>, vector<8x128xf32>
    %cst_12 = arith.constant 1.05070102 : f32
    %35 = vector.broadcast %cst_12 : f32 to vector<8x128xf32>
    %36 = arith.mulf %35, %34 : vector<8x128xf32>
    %c0_13 = arith.constant 0 : index
    %c0_14 = arith.constant 0 : index
    %37 = vector.load %arg1[%c0_13, %c0_14] : memref<8x16xbf16, #tpu.memory_space<vmem>>, vector<8x16xbf16>
    %c0_15 = arith.constant 0 : index
    %c0_16 = arith.constant 0 : index
    %38 = vector.load %arg4[%c0_15, %c0_16] : memref<16x512xbf16, #tpu.memory_space<vmem>>, vector<16x512xbf16>
    %cst_17 = arith.constant dense<0.000000e+00> : vector<8x512xf32>
    %39 = tpu.matmul %37, %38, %cst_17 {dimension_numbers = #tpu.dot_dimension_numbers<[1], [0], [0], [1], [0, 0, 1, 1], [], []>} : vector<8x16xbf16>, vector<16x512xbf16>, vector<8x512xf32> -> vector<8x512xf32>
    %40 = arith.truncf %36 : vector<8x128xf32> to vector<8x128xbf16>
    %c0_18 = arith.constant 0 : index
    %c0_19 = arith.constant 0 : index
    %41 = vector.load %arg5[%c0_18, %c0_19] : memref<128x512xbf16, #tpu.memory_space<vmem>>, vector<128x512xbf16>
    %cst_20 = arith.constant dense<0.000000e+00> : vector<8x512xf32>
    %42 = tpu.matmul %40, %41, %cst_20 {dimension_numbers = #tpu.dot_dimension_numbers<[1], [0], [0], [1], [0, 0, 1, 1], [], []>} : vector<8x128xbf16>, vector<128x512xbf16>, vector<8x512xf32> -> vector<8x512xf32>
    %43 = arith.addf %39, %42 : vector<8x512xf32>
    %c0_21 = arith.constant 0 : index
    %c0_22 = arith.constant 0 : index
    %44 = vector.load %arg6[%c0_21, %c0_22] : memref<1x512xf32, #tpu.memory_space<vmem>>, vector<1x512xf32>
    %45 = vector.broadcast %44 : vector<1x512xf32> to vector<8x512xf32>
    %46 = arith.addf %43, %45 : vector<8x512xf32>
    %c0_23 = arith.constant 0 : index
    %c0_24 = arith.constant 0 : index
    %47 = vector.load %arg7[%c0_23, %c0_24] : memref<1x512xf32, #tpu.memory_space<vmem>>, vector<1x512xf32>
    %c0_25 = arith.constant 0 : index
    %c0_26 = arith.constant 0 : index
    %48 = vector.load %arg8[%c0_25, %c0_26] : memref<1x512xf32, #tpu.memory_space<vmem>>, vector<1x512xf32>
    %cst_27 = arith.constant dense<0.000000e+00> : vector<8xf32>
    %49 = vector.multi_reduction <add>, %46, %cst_27 [1] : vector<8x512xf32> to vector<8xf32>
    %50 = vector.shape_cast %49 : vector<8xf32> to vector<8x1xf32>
    %cst_28 = arith.constant 5.120000e+02 : f32
    %51 = vector.broadcast %cst_28 : f32 to vector<8x1xf32>
    %52 = arith.divf %50, %51 : vector<8x1xf32>
    %53 = vector.broadcast %52 : vector<8x1xf32> to vector<8x512xf32>
    %54 = arith.subf %46, %53 : vector<8x512xf32>
    %55 = vector.broadcast %52 : vector<8x1xf32> to vector<8x512xf32>
    %56 = arith.subf %46, %55 : vector<8x512xf32>
    %57 = arith.mulf %54, %56 : vector<8x512xf32>
    %cst_29 = arith.constant dense<0.000000e+00> : vector<8xf32>
    %58 = vector.multi_reduction <add>, %57, %cst_29 [1] : vector<8x512xf32> to vector<8xf32>
    %59 = vector.shape_cast %58 : vector<8xf32> to vector<8x1xf32>
    %cst_30 = arith.constant 5.120000e+02 : f32
    %60 = vector.broadcast %cst_30 : f32 to vector<8x1xf32>
    %61 = arith.divf %59, %60 : vector<8x1xf32>
    %62 = vector.broadcast %52 : vector<8x1xf32> to vector<8x512xf32>
    %63 = arith.subf %46, %62 : vector<8x512xf32>
    %cst_31 = arith.constant 9.99999974E-6 : f32
    %64 = vector.broadcast %cst_31 : f32 to vector<8x1xf32>
    %65 = arith.addf %61, %64 : vector<8x1xf32>
    %66 = math.rsqrt %65 : vector<8x1xf32>
    %67 = vector.broadcast %66 : vector<8x1xf32> to vector<8x512xf32>
    %68 = arith.mulf %63, %67 : vector<8x512xf32>
    %69 = vector.broadcast %47 : vector<1x512xf32> to vector<8x512xf32>
    %70 = arith.mulf %68, %69 : vector<8x512xf32>
    %71 = vector.broadcast %48 : vector<1x512xf32> to vector<8x512xf32>
    %72 = arith.addf %70, %71 : vector<8x512xf32>
    %cst_32 = arith.constant 0.000000e+00 : f32
    %73 = vector.broadcast %cst_32 : f32 to vector<8x512xf32>
    %74 = arith.cmpf ogt, %72, %73 : vector<8x512xf32>
    %75 = math.exp %72 : vector<8x512xf32>
    %cst_33 = arith.constant 1.000000e+00 : f32
    %76 = vector.broadcast %cst_33 : f32 to vector<8x512xf32>
    %77 = arith.subf %75, %76 : vector<8x512xf32>
    %cst_34 = arith.constant 1.67326319 : f32
    %78 = vector.broadcast %cst_34 : f32 to vector<8x512xf32>
    %79 = arith.mulf %78, %77 : vector<8x512xf32>
    %80 = arith.select %74, %72, %79 : vector<8x512xi1>, vector<8x512xf32>
    %cst_35 = arith.constant 1.05070102 : f32
    %81 = vector.broadcast %cst_35 : f32 to vector<8x512xf32>
    %82 = arith.mulf %81, %80 : vector<8x512xf32>
    %83 = arith.truncf %82 : vector<8x512xf32> to vector<8x512xbf16>
    %c0_36 = arith.constant 0 : index
    %c0_37 = arith.constant 0 : index
    %84 = vector.load %arg9[%c0_36, %c0_37] : memref<512x128xbf16, #tpu.memory_space<vmem>>, vector<512x128xbf16>
    %cst_38 = arith.constant dense<0.000000e+00> : vector<8x128xf32>
    %85 = tpu.matmul %83, %84, %cst_38 {dimension_numbers = #tpu.dot_dimension_numbers<[1], [0], [0], [1], [0, 0, 1, 1], [], []>} : vector<8x512xbf16>, vector<512x128xbf16>, vector<8x128xf32> -> vector<8x128xf32>
    %c0_39 = arith.constant 0 : index
    %c0_40 = arith.constant 0 : index
    %86 = vector.load %arg10[%c0_39, %c0_40] : memref<1x128xf32, #tpu.memory_space<vmem>>, vector<1x128xf32>
    %87 = vector.broadcast %86 : vector<1x128xf32> to vector<8x128xf32>
    %88 = arith.addf %85, %87 : vector<8x128xf32>
    %89 = math.tanh %88 : vector<8x128xf32>
    %cst_41 = arith.constant 1.000000e+00 : f32
    %90 = vector.broadcast %cst_41 : f32 to vector<8x128xf32>
    %91 = arith.mulf %89, %90 : vector<8x128xf32>
    %c0_42 = arith.constant 0 : index
    %c0_43 = arith.constant 0 : index
    %92 = vector.load %arg11[%c0_42, %c0_43] : memref<8x128xf32, #tpu.memory_space<vmem>>, vector<8x128xf32>
    tpu.vector_store %arg11[%c0_42, %c0_43], %91 {strides = array<i32>} : memref<8x128xf32, #tpu.memory_space<vmem>>, vector<8x128xf32>,
    return
  }
}

</mosaic_0001>

<llo_original>
// kernel: tpu_custom_call.1
$region0: #{tpu_custom_call.1}
  #allocation0 [shape = 'u32[]', space=smem, size = 0x4, offset = 0x4, fixed_abs, tag = 'smem constant byte address 0x4 - core index']
  #allocation1 [shape = 'u32[144,128]{1,0:T(1,128)}', space=vmem, size = 0x12000, scoped, tag = 'internal scratch']
  %s0 = inlined_call_operand.hbm [shape: f32[8,128], index: 0, kind: input, shape index: {}]
  %s1 = inlined_call_operand.hbm [shape: bf16[8,16], index: 1, kind: input, shape index: {}]
  %s2 = inlined_call_operand.vmem [shape: f32[1,128], index: 2, kind: input, shape index: {}]
  %s3 = inlined_call_operand.vmem [shape: f32[1,128], index: 3, kind: input, shape index: {}]
  %s4 = inlined_call_operand.hbm [shape: bf16[16,512], index: 4, kind: input, shape index: {}]
  %s5 = inlined_call_operand.hbm [shape: bf16[128,512], index: 5, kind: input, shape index: {}]
  %s6 = inlined_call_operand.vmem [shape: f32[1,512], index: 6, kind: input, shape index: {}]
  %s7 = inlined_call_operand.vmem [shape: f32[1,512], index: 7, kind: input, shape index: {}]
  %s8 = inlined_call_operand.vmem [shape: f32[1,512], index: 8, kind: input, shape index: {}]
  %s9 = inlined_call_operand.hbm [shape: bf16[512,128], index: 9, kind: input, shape index: {}]
  %s10 = inlined_call_operand.vmem [shape: f32[1,128], index: 10, kind: input, shape index: {}]
  %s11 = inlined_call_operand.hbm [shape: f32[8,128], index: 11, kind: output, shape index: {}]
  %s12 = sld [smem:[#allocation0]]
  $region74: #{tpu_custom_call.1} parent=0
    _
  %s14 = ssub.s32 1, %s12
  %s15 = scalar_select 0, %s14, %s12
  $region1: #{tpu_custom_call.1} parent=0
    #allocation2 [shape = 'u8[4096]{0}', space=vmem, size = 0x1000, scoped, tag = 'input window, operand 0, single buffered']
    #allocation3 [shape = 's32[1]{0}', space=sflag, size = 0x4, scoped, tag = 'scoped memory for tpu_custom_call.1']
    #allocation4 [shape = 's32[1]{0}', space=sflag, size = 0x4, scoped, tag = 'scoped memory for tpu_custom_call.1']
    #allocation5 [shape = 'u8[2048]{0}', space=vmem, size = 0x800, scoped, tag = 'input window, operand 1, single buffered']
    #allocation6 [shape = 's32[1]{0}', space=sflag, size = 0x4, scoped, tag = 'scoped memory for tpu_custom_call.1']
    #allocation7 [shape = 'u8[16384]{0}', space=vmem, size = 0x4000, scoped, tag = 'input window, operand 4, single buffered']
    #allocation8 [shape = 'u8[131072]{0}', space=vmem, size = 0x20000, scoped, tag = 'input window, operand 5, single buffered']
    #allocation9 [shape = 's32[1]{0}', space=sflag, size = 0x4, scoped, tag = 'scoped memory for tpu_custom_call.1']
    #allocation10 [shape = 'u8[131072]{0}', space=vmem, size = 0x20000, scoped, tag = 'input window, operand 9, single buffered']
    #allocation11 [shape = 'u8[4096]{0}', space=vmem, size = 0x1000, scoped, tag = 'output window, operand 0, single buffered']
    %16 = vsyncpa [#allocation3], 0
    %17 = vsyncpa [#allocation6], 0
    %18 = vsyncpa [#allocation9], 0
    %19 = vsyncpa [#allocation4], 0
    // Predicated region
    $region2: #{tpu_custom_call.1} parent=1 // pred_check
      _
    $region3: #{tpu_custom_call.1} parent=1 // pred_check_branch
      %21 = sbr.rel (0) target = $region5
    $region4: #{tpu_custom_call.1} parent=1 // pred_region
      %s23 = ssub.s32 128, 128
      %24 = vsyncadd [#allocation3], %s23
      %s26 = sshll.u32 [#allocation2], 4
      %s27 = int_to_ptr.vmem [resolvable:$true] %s26
      %29 = dma.hbm_to_vmem [thread:$0]  %s0, 128, %s27, [#allocation3]
    $region5: #{tpu_custom_call.1} parent=1 // pred_fallthru
      _
    // Predicated region
    $region6: #{tpu_custom_call.1} parent=1 // pred_check
      _
    $region7: #{tpu_custom_call.1} parent=1 // pred_check_branch
      %31 = sbr.rel (0) target = $region9
    $region8: #{tpu_custom_call.1} parent=1 // pred_region
      %s33 = ssub.s32 64, 64
      %34 = vsyncadd [#allocation6], %s33
      %s36 = sshll.u32 [#allocation5], 4
      %s37 = int_to_ptr.vmem [resolvable:$true] %s36
      %39 = dma.hbm_to_vmem [thread:$0]  %s1, 64, %s37, [#allocation6]
    $region9: #{tpu_custom_call.1} parent=1 // pred_fallthru
      _
    // Predicated region
    $region10: #{tpu_custom_call.1} parent=1 // pred_check
      _
    $region11: #{tpu_custom_call.1} parent=1 // pred_check_branch
      %41 = sbr.rel (0) target = $region13
    $region12: #{tpu_custom_call.1} parent=1 // pred_region
      _
    $region13: #{tpu_custom_call.1} parent=1 // pred_fallthru
      _
    // Predicated region
    $region14: #{tpu_custom_call.1} parent=1 // pred_check
      _
    $region15: #{tpu_custom_call.1} parent=1 // pred_check_branch
      %43 = sbr.rel (0) target = $region17
    $region16: #{tpu_custom_call.1} parent=1 // pred_region
      _
    $region17: #{tpu_custom_call.1} parent=1 // pred_fallthru
      _
    // Predicated region
    $region18: #{tpu_custom_call.1} parent=1 // pred_check
      _
    $region19: #{tpu_custom_call.1} parent=1 // pred_check_branch
      %45 = sbr.rel (0) target = $region21
    $region20: #{tpu_custom_call.1} parent=1 // pred_region
      %s47 = ssub.s32 512, 512
      %48 = vsyncadd [#allocation6], %s47
      %s49 = sshll.u32 [#allocation7], 4
      %s50 = int_to_ptr.vmem [resolvable:$true] %s49
      %55 = dma.hbm_to_vmem [thread:$0]  %s4, 512, %s50, [#allocation6], 256, 256, 16
    $region21: #{tpu_custom_call.1} parent=1 // pred_fallthru
      _
    // Predicated region
    $region22: #{tpu_custom_call.1} parent=1 // pred_check
      _
    $region23: #{tpu_custom_call.1} parent=1 // pred_check_branch
      %57 = sbr.rel (0) target = $region25
    $region24: #{tpu_custom_call.1} parent=1 // pred_region
      %s59 = ssub.s32 4096, 4096
      %60 = vsyncadd [#allocation9], %s59
      %s61 = sshll.u32 [#allocation8], 4
      %s62 = int_to_ptr.vmem [resolvable:$true] %s61
      %67 = dma.hbm_to_vmem [thread:$0]  %s5, 4096, %s62, [#allocation9], 256, 256, 16
    $region25: #{tpu_custom_call.1} parent=1 // pred_fallthru
      _
    // Predicated region
    $region26: #{tpu_custom_call.1} parent=1 // pred_check
      _
    $region27: #{tpu_custom_call.1} parent=1 // pred_check_branch
      %69 = sbr.rel (0) target = $region29
    $region28: #{tpu_custom_call.1} parent=1 // pred_region
      _
    $region29: #{tpu_custom_call.1} parent=1 // pred_fallthru
      _
    // Predicated region
    $region30: #{tpu_custom_call.1} parent=1 // pred_check
      _
    $region31: #{tpu_custom_call.1} parent=1 // pred_check_branch
      %71 = sbr.rel (0) target = $region33
    $region32: #{tpu_custom_call.1} parent=1 // pred_region
      _
    $region33: #{tpu_custom_call.1} parent=1 // pred_fallthru
      _
    // Predicated region
    $region34: #{tpu_custom_call.1} parent=1 // pred_check
      _
    $region35: #{tpu_custom_call.1} parent=1 // pred_check_branch
      %73 = sbr.rel (0) target = $region37
    $region36: #{tpu_custom_call.1} parent=1 // pred_region
      _
    $region37: #{tpu_custom_call.1} parent=1 // pred_fallthru
      _
    // Predicated region
    $region38: #{tpu_custom_call.1} parent=1 // pred_check
      _
    $region39: #{tpu_custom_call.1} parent=1 // pred_check_branch
      %75 = sbr.rel (0) target = $region41
    $region40: #{tpu_custom_call.1} parent=1 // pred_region
      %s77 = ssub.s32 4096, 4096
      %78 = vsyncadd [#allocation9], %s77
      %s79 = sshll.u32 [#allocation10], 4
      %s80 = int_to_ptr.vmem [resolvable:$true] %s79
      %85 = dma.hbm_to_vmem [thread:$0]  %s9, 4096, %s80, [#allocation9], 64, 64, 4
    $region41: #{tpu_custom_call.1} parent=1 // pred_fallthru
      _
    // Predicated region
    $region42: #{tpu_custom_call.1} parent=1 // pred_check
      _
    $region43: #{tpu_custom_call.1} parent=1 // pred_check_branch
      %87 = sbr.rel (0) target = $region45
    $region44: #{tpu_custom_call.1} parent=1 // pred_region
      _
    $region45: #{tpu_custom_call.1} parent=1 // pred_fallthru
      _
    // Predicated region
    $region46: #{tpu_custom_call.1} parent=1 // pred_check
      _
    $region47: #{tpu_custom_call.1} parent=1 // pred_check_branch
      %89 = sbr.rel (0) target = $region49
    $region48: #{tpu_custom_call.1} parent=1 // pred_region
      %90 = dma.done [#allocation3], 128
    $region49: #{tpu_custom_call.1} parent=1 // pred_fallthru
      _
    // Predicated region
    $region50: #{tpu_custom_call.1} parent=1 // pred_check
      _
    $region51: #{tpu_custom_call.1} parent=1 // pred_check_branch
      %92 = sbr.rel (0) target = $region53
    $region52: #{tpu_custom_call.1} parent=1 // pred_region
      %93 = dma.done [#allocation6], 64
    $region53: #{tpu_custom_call.1} parent=1 // pred_fallthru
      _
    // Predicated region
    $region54: #{tpu_custom_call.1} parent=1 // pred_check
      _
    $region55: #{tpu_custom_call.1} parent=1 // pred_check_branch
      %95 = sbr.rel (0) target = $region57
    $region56: #{tpu_custom_call.1} parent=1 // pred_region
      %96 = dma.done [#allocation6], 512
    $region57: #{tpu_custom_call.1} parent=1 // pred_fallthru
      _
    // Predicated region
    $region58: #{tpu_custom_call.1} parent=1 // pred_check
      _
    $region59: #{tpu_custom_call.1} parent=1 // pred_check_branch
      %98 = sbr.rel (0) target = $region61
    $region60: #{tpu_custom_call.1} parent=1 // pred_region
      %99 = dma.done [#allocation9], 4096
    $region61: #{tpu_custom_call.1} parent=1 // pred_fallthru
      _
    // Predicated region
    $region62: #{tpu_custom_call.1} parent=1 // pred_check
      _
    $region63: #{tpu_custom_call.1} parent=1 // pred_check_branch
      %101 = sbr.rel (0) target = $region65
    $region64: #{tpu_custom_call.1} parent=1 // pred_region
      %102 = dma.done [#allocation9], 4096
    $region65: #{tpu_custom_call.1} parent=1 // pred_fallthru
      _
    %v104 = vld [vmem:[#allocation2] sm:$0xff]
    %v105 = vld [vmem:[%s2] sm:$0x1]
    %v106 = vld [vmem:[%s3] sm:$0x1]
    %107 = vadd.xlane.f32.xlu0 %v104
    %v108 = vpop.xlane.xlu0 %107
    %v109 = vrcp.pop 128.0
    %v110 = vmul.f32 %v108, %v109
    %v111 = vsub.f32 %v104, %v110
    %v112 = vmul.f32 %v111, %v111
    %113 = vadd.xlane.f32.xlu0 %v112
    %v114 = vpop.xlane.xlu0 %113
    %v115 = vmul.f32 %v114, %v109
    %v116 = vadd.f32 %v115, 1e-05
    %v117 = vrsqrt.pop %v116
    %v118 = vmul.f32 %v111, %v117
    %v120 = vlaneseq
    %v121 = vshrl.u32 %v120, 7
    %v122 = vsub.s32 0, %v121
    %v123 = vrot.slane %v105, %v122
    %v125 = vmul.f32 %v118, %v123
    %v127 = vlaneseq
    %v128 = vshrl.u32 %v127, 7
    %v129 = vsub.s32 0, %v128
    %v130 = vrot.slane %v106, %v129
    %v132 = vadd.f32 %v125, %v130
    %vm133 = vcmp.gt.f32.partialorder %v132, 0.0
    %v134 = vmul.f32 %v132, 1.442695
    %v135 = vpow.pop %v134
    %v136 = vsub.f32 %v135, 1.0
    %v137 = vmul.f32 %v136, 1.6732632
    %v138 = vsel %vm133, %v132, %v137
    %v139 = vmul.f32 %v138, 1.050701
    %v140 = vld [vmem:[#allocation5] sm:$0xf]
    %v141 = vld [vmem:[#allocation7] sm:$0xff]
    %v142 = vld [vmem:[#allocation7 + $0x8] sm:$0xff]
    %v143 = vld [vmem:[#allocation7 + $0x10] sm:$0xff]
    %v144 = vld [vmem:[#allocation7 + $0x18] sm:$0xff]
    %v145 = vpack.c.bf16 %v139, %v139
    %v146 = vld [vmem:[#allocation8] sm:$0xff]
    %v147 = vld [vmem:[#allocation8 + $0x8] sm:$0xff]
    %v148 = vld [vmem:[#allocation8 + $0x10] sm:$0xff]
    %v149 = vld [vmem:[#allocation8 + $0x18] sm:$0xff]
    %v150 = vld [vmem:[#allocation8 + $0x20] sm:$0xff]
    %v151 = vld [vmem:[#allocation8 + $0x28] sm:$0xff]
    %v152 = vld [vmem:[#allocation8 + $0x30] sm:$0xff]
    %v153 = vld [vmem:[#allocation8 + $0x38] sm:$0xff]
    %v154 = vld [vmem:[#allocation8 + $0x40] sm:$0xff]
    %v155 = vld [vmem:[#allocation8 + $0x48] sm:$0xff]
    %v156 = vld [vmem:[#allocation8 + $0x50] sm:$0xff]
    %v157 = vld [vmem:[#allocation8 + $0x58] sm:$0xff]
    %v158 = vld [vmem:[#allocation8 + $0x60] sm:$0xff]
    %v159 = vld [vmem:[#allocation8 + $0x68] sm:$0xff]
    %v160 = vld [vmem:[#allocation8 + $0x70] sm:$0xff]
    %v161 = vld [vmem:[#allocation8 + $0x78] sm:$0xff]
    %v162 = vld [vmem:[#allocation8 + $0x80] sm:$0xff]
    %v163 = vld [vmem:[#allocation8 + $0x88] sm:$0xff]
    %v164 = vld [vmem:[#allocation8 + $0x90] sm:$0xff]
    %v165 = vld [vmem:[#allocation8 + $0x98] sm:$0xff]
    %v166 = vld [vmem:[#allocation8 + $0xa0] sm:$0xff]
    %v167 = vld [vmem:[#allocation8 + $0xa8] sm:$0xff]
    %v168 = vld [vmem:[#allocation8 + $0xb0] sm:$0xff]
    %v169 = vld [vmem:[#allocation8 + $0xb8] sm:$0xff]
    %v170 = vld [vmem:[#allocation8 + $0xc0] sm:$0xff]
    %v171 = vld [vmem:[#allocation8 + $0xc8] sm:$0xff]
    %v172 = vld [vmem:[#allocation8 + $0xd0] sm:$0xff]
    %v173 = vld [vmem:[#allocation8 + $0xd8] sm:$0xff]
    %v174 = vld [vmem:[#allocation8 + $0xe0] sm:$0xff]
    %v175 = vld [vmem:[#allocation8 + $0xe8] sm:$0xff]
    %v176 = vld [vmem:[#allocation8 + $0xf0] sm:$0xff]
    %v177 = vld [vmem:[#allocation8 + $0xf8] sm:$0xff]
    %v210 = vunpack.c.l.b16 %v146
    %v211 = vunpack.c.h.b16 %v146
    %v212 = vunpack.c.l.b16 %v147
    %v213 = vunpack.c.h.b16 %v147
    %v214 = vunpack.c.l.b16 %v148
    %v215 = vunpack.c.h.b16 %v148
    %v216 = vunpack.c.l.b16 %v149
    %v217 = vunpack.c.h.b16 %v149
    %v218 = vunpack.c.l.b16 %v150
    %v219 = vunpack.c.h.b16 %v150
    %v220 = vunpack.c.l.b16 %v151
    %v221 = vunpack.c.h.b16 %v151
    %v222 = vunpack.c.l.b16 %v152
    %v223 = vunpack.c.h.b16 %v152
    %v224 = vunpack.c.l.b16 %v153
    %v225 = vunpack.c.h.b16 %v153
    %v226 = vunpack.c.l.b16 %v154
    %v227 = vunpack.c.h.b16 %v154
    %v228 = vunpack.c.l.b16 %v155
    %v229 = vunpack.c.h.b16 %v155
    %v230 = vunpack.c.l.b16 %v156
    %v231 = vunpack.c.h.b16 %v156
    %v232 = vunpack.c.l.b16 %v157
    %v233 = vunpack.c.h.b16 %v157
    %v234 = vunpack.c.l.b16 %v158
    %v235 = vunpack.c.h.b16 %v158
    %v236 = vunpack.c.l.b16 %v159
    %v237 = vunpack.c.h.b16 %v159
    %v238 = vunpack.c.l.b16 %v160
    %v239 = vunpack.c.h.b16 %v160
    %v240 = vunpack.c.l.b16 %v161
    %v241 = vunpack.c.h.b16 %v161
    %v242 = vunpack.c.l.b16 %v162
    %v243 = vunpack.c.h.b16 %v162
    %v244 = vunpack.c.l.b16 %v163
    %v245 = vunpack.c.h.b16 %v163
    %v246 = vunpack.c.l.b16 %v164
    %v247 = vunpack.c.h.b16 %v164
    %v248 = vunpack.c.l.b16 %v165
    %v249 = vunpack.c.h.b16 %v165
    %v250 = vunpack.c.l.b16 %v166
    %v251 = vunpack.c.h.b16 %v166
    %v252 = vunpack.c.l.b16 %v167
    %v253 = vunpack.c.h.b16 %v167
    %v254 = vunpack.c.l.b16 %v168
    %v255 = vunpack.c.h.b16 %v168
    %v256 = vunpack.c.l.b16 %v169
    %v257 = vunpack.c.h.b16 %v169
    %v258 = vunpack.c.l.b16 %v170
    %v259 = vunpack.c.h.b16 %v170
    %v260 = vunpack.c.l.b16 %v171
    %v261 = vunpack.c.h.b16 %v171
    %v262 = vunpack.c.l.b16 %v172
    %v263 = vunpack.c.h.b16 %v172
    %v264 = vunpack.c.l.b16 %v173
    %v265 = vunpack.c.h.b16 %v173
    %v266 = vunpack.c.l.b16 %v174
    %v267 = vunpack.c.h.b16 %v174
    %v268 = vunpack.c.l.b16 %v175
    %v269 = vunpack.c.h.b16 %v175
    %v270 = vunpack.c.l.b16 %v176
    %v271 = vunpack.c.h.b16 %v176
    %v272 = vunpack.c.l.b16 %v177
    %v273 = vunpack.c.h.b16 %v177
    %v274 = vpack.c.b16 %v214, %v210
    %v275 = vpack.c.b16 %v215, %v211
    %v276 = vpack.c.b16 %v216, %v212
    %v277 = vpack.c.b16 %v217, %v213
    %v278 = vpack.c.b16 %v222, %v218
    %v279 = vpack.c.b16 %v223, %v219
    %v280 = vpack.c.b16 %v224, %v220
    %v281 = vpack.c.b16 %v225, %v221
    %v282 = vpack.c.b16 %v230, %v226
    %v283 = vpack.c.b16 %v231, %v227
    %v284 = vpack.c.b16 %v232, %v228
    %v285 = vpack.c.b16 %v233, %v229
    %v286 = vpack.c.b16 %v238, %v234
    %v287 = vpack.c.b16 %v239, %v235
    %v288 = vpack.c.b16 %v240, %v236
    %v289 = vpack.c.b16 %v241, %v237
    %v290 = vpack.c.b16 %v246, %v242
    %v291 = vpack.c.b16 %v247, %v243
    %v292 = vpack.c.b16 %v248, %v244
    %v293 = vpack.c.b16 %v249, %v245
    %v294 = vpack.c.b16 %v254, %v250
    %v295 = vpack.c.b16 %v255, %v251
    %v296 = vpack.c.b16 %v256, %v252
    %v297 = vpack.c.b16 %v257, %v253
    %v298 = vpack.c.b16 %v262, %v258
    %v299 = vpack.c.b16 %v263, %v259
    %v300 = vpack.c.b16 %v264, %v260
    %v301 = vpack.c.b16 %v265, %v261
    %v302 = vpack.c.b16 %v270, %v266
    %v303 = vpack.c.b16 %v271, %v267
    %v304 = vpack.c.b16 %v272, %v268
    %v305 = vpack.c.b16 %v273, %v269
    %338 = vmatprep.subr.bf16.mxu0 %v275
    %339 = vmatpush1.bf16.msra.mxu0 %v274
    %340 = vmatprep.subr.bf16.mxu0 %v279
    %341 = vmatpush1.bf16.msra.mxu0 %v278
    %342 = vmatprep.subr.bf16.mxu0 %v283
    %343 = vmatpush1.bf16.msra.mxu0 %v282
    %344 = vmatprep.subr.bf16.mxu0 %v287
    %345 = vmatpush1.bf16.msra.mxu0 %v286
    %346 = vmatprep.subr.bf16.mxu0 %v291
    %347 = vmatpush1.bf16.msra.mxu0 %v290
    %348 = vmatprep.subr.bf16.mxu0 %v295
    %349 = vmatpush1.bf16.msra.mxu0 %v294
    %350 = vmatprep.subr.bf16.mxu0 %v299
    %351 = vmatpush1.bf16.msra.mxu0 %v298
    %352 = vmatprep.subr.bf16.mxu0 %v303
    %353 = vmatpush1.bf16.msra.mxu0 %v302
    %354 = vmatprep.subr.bf16.mxu0 0
    %355 = vmatpush1.bf16.msra.mxu0 0
    %356 = vmatprep.subr.bf16.mxu0 0
    %357 = vmatpush1.bf16.msra.mxu0 0
    %358 = vmatprep.subr.bf16.mxu0 0
    %359 = vmatpush1.bf16.msra.mxu0 0
    %360 = vmatprep.subr.bf16.mxu0 0
    %361 = vmatpush1.bf16.msra.mxu0 0
    %362 = vmatprep.subr.bf16.mxu0 0
    %363 = vmatpush1.bf16.msra.mxu0 0
    %364 = vmatprep.subr.bf16.mxu0 0
    %365 = vmatpush1.bf16.msra.mxu0 0
    %366 = vmatprep.subr.bf16.mxu0 0
    %367 = vmatpush1.bf16.msra.mxu0 0
    %368 = vmatprep.subr.bf16.mxu0 0
    %369 = vmatpush1.bf16.msra.mxu0 0
    %370 = vmatprep.mubr.bf16.mxu0 0
    %371 = vmatmul.mubr.bf16.gmra.mrb[0].mxu0 %v145
    %v372 = vpop.f32.mrb[0].mxu0
    %v373 = vadd.f32 0.0, %v372
    %v374 = vpop.f32.mrb[0].mxu0
    %v375 = vadd.f32 0.0, %v374
    %v376 = vpop.f32.mrb[0].mxu0
    %v377 = vpop.f32.mrb[0].mxu0
    %378 = vdwg.mxu0
    %379 = vmatprep.subr.bf16.mxu0 %v277
    %380 = vmatpush1.bf16.msra.mxu0 %v276
    %381 = vmatprep.subr.bf16.mxu0 %v281
    %382 = vmatpush1.bf16.msra.mxu0 %v280
    %383 = vmatprep.subr.bf16.mxu0 %v285
    %384 = vmatpush1.bf16.msra.mxu0 %v284
    %385 = vmatprep.subr.bf16.mxu0 %v289
    %386 = vmatpush1.bf16.msra.mxu0 %v288
    %387 = vmatprep.subr.bf16.mxu0 %v293
    %388 = vmatpush1.bf16.msra.mxu0 %v292
    %389 = vmatprep.subr.bf16.mxu0 %v297
    %390 = vmatpush1.bf16.msra.mxu0 %v296
    %391 = vmatprep.subr.bf16.mxu0 %v301
    %392 = vmatpush1.bf16.msra.mxu0 %v300
    %393 = vmatprep.subr.bf16.mxu0 %v305
    %394 = vmatpush1.bf16.msra.mxu0 %v304
    %395 = vmatprep.subr.bf16.mxu0 0
    %396 = vmatpush1.bf16.msra.mxu0 0
    %397 = vmatprep.subr.bf16.mxu0 0
    %398 = vmatpush1.bf16.msra.mxu0 0
    %399 = vmatprep.subr.bf16.mxu0 0
    %400 = vmatpush1.bf16.msra.mxu0 0
    %401 = vmatprep.subr.bf16.mxu0 0
    %402 = vmatpush1.bf16.msra.mxu0 0
    %403 = vmatprep.subr.bf16.mxu0 0
    %404 = vmatpush1.bf16.msra.mxu0 0
    %405 = vmatprep.subr.bf16.mxu0 0
    %406 = vmatpush1.bf16.msra.mxu0 0
    %407 = vmatprep.subr.bf16.mxu0 0
    %408 = vmatpush1.bf16.msra.mxu0 0
    %409 = vmatprep.subr.bf16.mxu0 0
    %410 = vmatpush1.bf16.msra.mxu0 0
    %411 = vmatprep.mubr.bf16.mxu0 0
    %412 = vmatmul.mubr.bf16.gmra.mrb[0].mxu0 %v145
    %v413 = vpop.f32.mrb[0].mxu0
    %v414 = vadd.f32 0.0, %v413
    %v415 = vpop.f32.mrb[0].mxu0
    %v416 = vadd.f32 0.0, %v415
    %v417 = vpop.f32.mrb[0].mxu0
    %v418 = vpop.f32.mrb[0].mxu0
    %419 = vdwg.mxu0
    %v424 = vunpack.c.l.b16 %v141
    %v425 = vunpack.c.h.b16 %v141
    %v426 = vunpack.c.l.b16 %v142
    %v427 = vunpack.c.h.b16 %v142
    %v428 = vunpack.c.l.b16 %v143
    %v429 = vunpack.c.h.b16 %v143
    %v430 = vunpack.c.l.b16 %v144
    %v431 = vunpack.c.h.b16 %v144
    %v432 = vpack.c.b16 %v428, %v424
    %v433 = vpack.c.b16 %v429, %v425
    %v434 = vpack.c.b16 %v430, %v426
    %v435 = vpack.c.b16 %v431, %v427
    %vm440 = vcmask 130048
    %v442 = vsel %vm440, %v140, 0
    %444 = vmatprep.subr.bf16.mxu0 %v433
    %445 = vmatpush1.bf16.msra.mxu0 %v432
    %446 = vmatprep.subr.bf16.mxu0 0
    %447 = vmatpush1.bf16.msra.mxu0 0
    %448 = vmatprep.subr.bf16.mxu0 0
    %449 = vmatpush1.bf16.msra.mxu0 0
    %450 = vmatprep.subr.bf16.mxu0 0
    %451 = vmatpush1.bf16.msra.mxu0 0
    %452 = vmatprep.subr.bf16.mxu0 0
    %453 = vmatpush1.bf16.msra.mxu0 0
    %454 = vmatprep.subr.bf16.mxu0 0
    %455 = vmatpush1.bf16.msra.mxu0 0
    %456 = vmatprep.subr.bf16.mxu0 0
    %457 = vmatpush1.bf16.msra.mxu0 0
    %458 = vmatprep.subr.bf16.mxu0 0
    %459 = vmatpush1.bf16.msra.mxu0 0
    %460 = vmatprep.subr.bf16.mxu0 0
    %461 = vmatpush1.bf16.msra.mxu0 0
    %462 = vmatprep.subr.bf16.mxu0 0
    %463 = vmatpush1.bf16.msra.mxu0 0
    %464 = vmatprep.subr.bf16.mxu0 0
    %465 = vmatpush1.bf16.msra.mxu0 0
    %466 = vmatprep.subr.bf16.mxu0 0
    %467 = vmatpush1.bf16.msra.mxu0 0
    %468 = vmatprep.subr.bf16.mxu0 0
    %469 = vmatpush1.bf16.msra.mxu0 0
    %470 = vmatprep.subr.bf16.mxu0 0
    %471 = vmatpush1.bf16.msra.mxu0 0
    %472 = vmatprep.subr.bf16.mxu0 0
    %473 = vmatpush1.bf16.msra.mxu0 0
    %474 = vmatprep.subr.bf16.mxu0 0
    %475 = vmatpush1.bf16.msra.mxu0 0
    %476 = vmatprep.mubr.bf16.mxu0 0
    %477 = vmatmul.mubr.bf16.gmra.mrb[0].mxu0 %v442
    %v478 = vpop.f32.mrb[0].mxu0
    %v479 = vadd.f32 %v373, %v478
    %v480 = vpop.f32.mrb[0].mxu0
    %v481 = vadd.f32 %v375, %v480
    %v482 = vpop.f32.mrb[0].mxu0
    %v483 = vpop.f32.mrb[0].mxu0
    %484 = vdwg.mxu0
    %485 = vmatprep.subr.bf16.mxu0 %v435
    %486 = vmatpush1.bf16.msra.mxu0 %v434
    %487 = vmatprep.subr.bf16.mxu0 0
    %488 = vmatpush1.bf16.msra.mxu0 0
    %489 = vmatprep.subr.bf16.mxu0 0
    %490 = vmatpush1.bf16.msra.mxu0 0
    %491 = vmatprep.subr.bf16.mxu0 0
    %492 = vmatpush1.bf16.msra.mxu0 0
    %493 = vmatprep.subr.bf16.mxu0 0
    %494 = vmatpush1.bf16.msra.mxu0 0
    %495 = vmatprep.subr.bf16.mxu0 0
    %496 = vmatpush1.bf16.msra.mxu0 0
    %497 = vmatprep.subr.bf16.mxu0 0
    %498 = vmatpush1.bf16.msra.mxu0 0
    %499 = vmatprep.subr.bf16.mxu0 0
    %500 = vmatpush1.bf16.msra.mxu0 0
    %501 = vmatprep.subr.bf16.mxu0 0
    %502 = vmatpush1.bf16.msra.mxu0 0
    %503 = vmatprep.subr.bf16.mxu0 0
    %504 = vmatpush1.bf16.msra.mxu0 0
    %505 = vmatprep.subr.bf16.mxu0 0
    %506 = vmatpush1.bf16.msra.mxu0 0
    %507 = vmatprep.subr.bf16.mxu0 0
    %508 = vmatpush1.bf16.msra.mxu0 0
    %509 = vmatprep.subr.bf16.mxu0 0
    %510 = vmatpush1.bf16.msra.mxu0 0
    %511 = vmatprep.subr.bf16.mxu0 0
    %512 = vmatpush1.bf16.msra.mxu0 0
    %513 = vmatprep.subr.bf16.mxu0 0
    %514 = vmatpush1.bf16.msra.mxu0 0
    %515 = vmatprep.subr.bf16.mxu0 0
    %516 = vmatpush1.bf16.msra.mxu0 0
    %517 = vmatprep.mubr.bf16.mxu0 0
    %518 = vmatmul.mubr.bf16.gmra.mrb[0].mxu0 %v442
    %v519 = vpop.f32.mrb[0].mxu0
    %v520 = vadd.f32 %v414, %v519
    %v521 = vpop.f32.mrb[0].mxu0
    %v522 = vadd.f32 %v416, %v521
    %v523 = vpop.f32.mrb[0].mxu0
    %v524 = vpop.f32.mrb[0].mxu0
    %525 = vdwg.mxu0
    %v526 = vld [vmem:[%s6] sm:$0xf]
    %v528 = vlaneseq
    %v529 = vshrl.u32 %v528, 7
    %v530 = vsub.s32 0, %v529
    %v531 = vrot.slane %v526, %v530
    %v532 = vlaneseq
    %v533 = vshrl.u32 %v532, 7
    %v534 = vsub.s32 1, %v533
    %v535 = vrot.slane %v526, %v534
    %v536 = vlaneseq
    %v537 = vshrl.u32 %v536, 7
    %v538 = vsub.s32 2, %v537
    %v539 = vrot.slane %v526, %v538
    %v540 = vlaneseq
    %v541 = vshrl.u32 %v540, 7
    %v542 = vsub.s32 3, %v541
    %v543 = vrot.slane %v526, %v542
    %v548 = vadd.f32 %v479, %v531
    %v549 = vadd.f32 %v481, %v535
    %v550 = vadd.f32 %v520, %v539
    %v551 = vadd.f32 %v522, %v543
    %v552 = vld [vmem:[%s7] sm:$0xf]
    %v553 = vld [vmem:[%s8] sm:$0xf]
    %v554 = vadd.f32 %v548, %v549
    %v555 = vadd.f32 %v554, %v550
    %v556 = vadd.f32 %v555, %v551
    %557 = vadd.xlane.f32.xlu0 %v556
    %v558 = vpop.xlane.xlu0 %557
    %v559 = vrcp.pop 512.0
    %v560 = vmul.f32 %v558, %v559
    %v561 = vsub.f32 %v548, %v560
    %v562 = vsub.f32 %v549, %v560
    %v563 = vsub.f32 %v550, %v560
    %v564 = vsub.f32 %v551, %v560
    %v565 = vmul.f32 %v561, %v561
    %v566 = vmul.f32 %v562, %v562
    %v567 = vmul.f32 %v563, %v563
    %v568 = vmul.f32 %v564, %v564
    %v569 = vadd.f32 %v565, %v566
    %v570 = vadd.f32 %v569, %v567
    %v571 = vadd.f32 %v570, %v568
    %572 = vadd.xlane.f32.xlu0 %v571
    %v573 = vpop.xlane.xlu0 %572
    %v574 = vmul.f32 %v573, %v559
    %v575 = vadd.f32 %v574, 1e-05
    %v576 = vrsqrt.pop %v575
    %v577 = vmul.f32 %v561, %v576
    %v578 = vmul.f32 %v562, %v576
    %v579 = vmul.f32 %v563, %v576
    %v580 = vmul.f32 %v564, %v576
    %v582 = vlaneseq
    %v583 = vshrl.u32 %v582, 7
    %v584 = vsub.s32 0, %v583
    %v585 = vrot.slane %v552, %v584
    %v586 = vlaneseq
    %v587 = vshrl.u32 %v586, 7
    %v588 = vsub.s32 1, %v587
    %v589 = vrot.slane %v552, %v588
    %v590 = vlaneseq
    %v591 = vshrl.u32 %v590, 7
    %v592 = vsub.s32 2, %v591
    %v593 = vrot.slane %v552, %v592
    %v594 = vlaneseq
    %v595 = vshrl.u32 %v594, 7
    %v596 = vsub.s32 3, %v595
    %v597 = vrot.slane %v552, %v596
    %v602 = vmul.f32 %v577, %v585
    %v603 = vmul.f32 %v578, %v589
    %v604 = vmul.f32 %v579, %v593
    %v605 = vmul.f32 %v580, %v597
    %v607 = vlaneseq
    %v608 = vshrl.u32 %v607, 7
    %v609 = vsub.s32 0, %v608
    %v610 = vrot.slane %v553, %v609
    %v611 = vlaneseq
    %v612 = vshrl.u32 %v611, 7
    %v613 = vsub.s32 1, %v612
    %v614 = vrot.slane %v553, %v613
    %v615 = vlaneseq
    %v616 = vshrl.u32 %v615, 7
    %v617 = vsub.s32 2, %v616
    %v618 = vrot.slane %v553, %v617
    %v619 = vlaneseq
    %v620 = vshrl.u32 %v619, 7
    %v621 = vsub.s32 3, %v620
    %v622 = vrot.slane %v553, %v621
    %v627 = vadd.f32 %v602, %v610
    %v628 = vadd.f32 %v603, %v614
    %v629 = vadd.f32 %v604, %v618
    %v630 = vadd.f32 %v605, %v622
    %vm631 = vcmp.gt.f32.partialorder %v627, 0.0
    %vm632 = vcmp.gt.f32.partialorder %v628, 0.0
    %vm633 = vcmp.gt.f32.partialorder %v629, 0.0
    %vm634 = vcmp.gt.f32.partialorder %v630, 0.0
    %v635 = vmul.f32 %v627, 1.442695
    %v636 = vpow.pop %v635
    %v637 = vmul.f32 %v628, 1.442695
    %v638 = vpow.pop %v637
    %v639 = vmul.f32 %v629, 1.442695
    %v640 = vpow.pop %v639
    %v641 = vmul.f32 %v630, 1.442695
    %v642 = vpow.pop %v641
    %v643 = vsub.f32 %v636, 1.0
    %v644 = vsub.f32 %v638, 1.0
    %v645 = vsub.f32 %v640, 1.0
    %v646 = vsub.f32 %v642, 1.0
    %v647 = vmul.f32 %v643, 1.6732632
    %v648 = vmul.f32 %v644, 1.6732632
    %v649 = vmul.f32 %v645, 1.6732632
    %v650 = vmul.f32 %v646, 1.6732632
    %v651 = vsel %vm631, %v627, %v647
    %v652 = vsel %vm632, %v628, %v648
    %v653 = vsel %vm633, %v629, %v649
    %v654 = vsel %vm634, %v630, %v650
    %v655 = vmul.f32 %v651, 1.050701
    %v656 = vmul.f32 %v652, 1.050701
    %v657 = vmul.f32 %v653, 1.050701
    %v658 = vmul.f32 %v654, 1.050701
    %v659 = vpack.c.bf16 %v655, %v655
    %v660 = vpack.c.bf16 %v656, %v656
    %v661 = vpack.c.bf16 %v657, %v657
    %v662 = vpack.c.bf16 %v658, %v658
    %v663 = vld [vmem:[#allocation10] sm:$0xf]
    %v664 = vld [vmem:[#allocation10 + $0x4] sm:$0xf]
    %v665 = vld [vmem:[#allocation10 + $0x8] sm:$0xf]
    %v666 = vld [vmem:[#allocation10 + $0xc] sm:$0xf]
    %v667 = vld [vmem:[#allocation10 + $0x10] sm:$0xf]
    %v668 = vld [vmem:[#allocation10 + $0x14] sm:$0xf]
    %v669 = vld [vmem:[#allocation10 + $0x18] sm:$0xf]
    %v670 = vld [vmem:[#allocation10 + $0x1c] sm:$0xf]
    %v671 = vld [vmem:[#allocation10 + $0x20] sm:$0xf]
    %v672 = vld [vmem:[#allocation10 + $0x24] sm:$0xf]
    %v673 = vld [vmem:[#allocation10 + $0x28] sm:$0xf]
    %v674 = vld [vmem:[#allocation10 + $0x2c] sm:$0xf]
    %v675 = vld [vmem:[#allocation10 + $0x30] sm:$0xf]
    %v676 = vld [vmem:[#allocation10 + $0x34] sm:$0xf]
    %v677 = vld [vmem:[#allocation10 + $0x38] sm:$0xf]
    %v678 = vld [vmem:[#allocation10 + $0x3c] sm:$0xf]
    %v679 = vld [vmem:[#allocation10 + $0x40] sm:$0xf]
    %v680 = vld [vmem:[#allocation10 + $0x44] sm:$0xf]
    %v681 = vld [vmem:[#allocation10 + $0x48] sm:$0xf]
    %v682 = vld [vmem:[#allocation10 + $0x4c] sm:$0xf]
    %v683 = vld [vmem:[#allocation10 + $0x50] sm:$0xf]
    %v684 = vld [vmem:[#allocation10 + $0x54] sm:$0xf]
    %v685 = vld [vmem:[#allocation10 + $0x58] sm:$0xf]
    %v686 = vld [vmem:[#allocation10 + $0x5c] sm:$0xf]
    %v687 = vld [vmem:[#allocation10 + $0x60] sm:$0xf]
    %v688 = vld [vmem:[#allocation10 + $0x64] sm:$0xf]
    %v689 = vld [vmem:[#allocation10 + $0x68] sm:$0xf]
    %v690 = vld [vmem:[#allocation10 + $0x6c] sm:$0xf]
    %v691 = vld [vmem:[#allocation10 + $0x70] sm:$0xf]
    %v692 = vld [vmem:[#allocation10 + $0x74] sm:$0xf]
    %v693 = vld [vmem:[#allocation10 + $0x78] sm:$0xf]
    %v694 = vld [vmem:[#allocation10 + $0x7c] sm:$0xf]
    %v695 = vld [vmem:[#allocation10 + $0x80] sm:$0xf]
    %v696 = vld [vmem:[#allocation10 + $0x84] sm:$0xf]
    %v697 = vld [vmem:[#allocation10 + $0x88] sm:$0xf]
    %v698 = vld [vmem:[#allocation10 + $0x8c] sm:$0xf]
    %v699 = vld [vmem:[#allocation10 + $0x90] sm:$0xf]
    %v700 = vld [vmem:[#allocation10 + $0x94] sm:$0xf]
    %v701 = vld [vmem:[#allocation10 + $0x98] sm:$0xf]
    %v702 = vld [vmem:[#allocation10 + $0x9c] sm:$0xf]
    %v703 = vld [vmem:[#allocation10 + $0xa0] sm:$0xf]
    %v704 = vld [vmem:[#allocation10 + $0xa4] sm:$0xf]
    %v705 = vld [vmem:[#allocation10 + $0xa8] sm:$0xf]
    %v706 = vld [vmem:[#allocation10 + $0xac] sm:$0xf]
    %v707 = vld [vmem:[#allocation10 + $0xb0] sm:$0xf]
    %v708 = vld [vmem:[#allocation10 + $0xb4] sm:$0xf]
    %v709 = vld [vmem:[#allocation10 + $0xb8] sm:$0xf]
    %v710 = vld [vmem:[#allocation10 + $0xbc] sm:$0xf]
    %v711 = vld [vmem:[#allocation10 + $0xc0] sm:$0xf]
    %v712 = vld [vmem:[#allocation10 + $0xc4] sm:$0xf]
    %v713 = vld [vmem:[#allocation10 + $0xc8] sm:$0xf]
    %v714 = vld [vmem:[#allocation10 + $0xcc] sm:$0xf]
    %v715 = vld [vmem:[#allocation10 + $0xd0] sm:$0xf]
    %v716 = vld [vmem:[#allocation10 + $0xd4] sm:$0xf]
    %v717 = vld [vmem:[#allocation10 + $0xd8] sm:$0xf]
    %v718 = vld [vmem:[#allocation10 + $0xdc] sm:$0xf]
    %v719 = vld [vmem:[#allocation10 + $0xe0] sm:$0xf]
    %v720 = vld [vmem:[#allocation10 + $0xe4] sm:$0xf]
    %v721 = vld [vmem:[#allocation10 + $0xe8] sm:$0xf]
    %v722 = vld [vmem:[#allocation10 + $0xec] sm:$0xf]
    %v723 = vld [vmem:[#allocation10 + $0xf0] sm:$0xf]
    %v724 = vld [vmem:[#allocation10 + $0xf4] sm:$0xf]
    %v725 = vld [vmem:[#allocation10 + $0xf8] sm:$0xf]
    %v726 = vld [vmem:[#allocation10 + $0xfc] sm:$0xf]
    %v727 = vld [vmem:[%s10] sm:$0x1]
    %v729 = vlaneseq
    %v730 = vshrl.u32 %v729, 7
    %v731 = vsub.s32 0, %v730
    %v732 = vrot.slane %v727, %v731
    %v798 = vunpack.c.l.b16 %v663
    %v799 = vunpack.c.l.b16 %v664
    %v800 = vunpack.c.l.b16 %v665
    %v801 = vunpack.c.l.b16 %v666
    %v802 = vunpack.c.l.b16 %v667
    %v803 = vunpack.c.l.b16 %v668
    %v804 = vunpack.c.l.b16 %v669
    %v805 = vunpack.c.l.b16 %v670
    %v806 = vunpack.c.l.b16 %v671
    %v807 = vunpack.c.l.b16 %v672
    %v808 = vunpack.c.l.b16 %v673
    %v809 = vunpack.c.l.b16 %v674
    %v810 = vunpack.c.l.b16 %v675
    %v811 = vunpack.c.l.b16 %v676
    %v812 = vunpack.c.l.b16 %v677
    %v813 = vunpack.c.l.b16 %v678
    %v814 = vunpack.c.l.b16 %v679
    %v815 = vunpack.c.l.b16 %v680
    %v816 = vunpack.c.l.b16 %v681
    %v817 = vunpack.c.l.b16 %v682
    %v818 = vunpack.c.l.b16 %v683
    %v819 = vunpack.c.l.b16 %v684
    %v820 = vunpack.c.l.b16 %v685
    %v821 = vunpack.c.l.b16 %v686
    %v822 = vunpack.c.l.b16 %v687
    %v823 = vunpack.c.l.b16 %v688
    %v824 = vunpack.c.l.b16 %v689
    %v825 = vunpack.c.l.b16 %v690
    %v826 = vunpack.c.l.b16 %v691
    %v827 = vunpack.c.l.b16 %v692
    %v828 = vunpack.c.l.b16 %v693
    %v829 = vunpack.c.l.b16 %v694
    %v830 = vunpack.c.l.b16 %v695
    %v831 = vunpack.c.l.b16 %v696
    %v832 = vunpack.c.l.b16 %v697
    %v833 = vunpack.c.l.b16 %v698
    %v834 = vunpack.c.l.b16 %v699
    %v835 = vunpack.c.l.b16 %v700
    %v836 = vunpack.c.l.b16 %v701
    %v837 = vunpack.c.l.b16 %v702
    %v838 = vunpack.c.l.b16 %v703
    %v839 = vunpack.c.l.b16 %v704
    %v840 = vunpack.c.l.b16 %v705
    %v841 = vunpack.c.l.b16 %v706
    %v842 = vunpack.c.l.b16 %v707
    %v843 = vunpack.c.l.b16 %v708
    %v844 = vunpack.c.l.b16 %v709
    %v845 = vunpack.c.l.b16 %v710
    %v846 = vunpack.c.l.b16 %v711
    %v847 = vunpack.c.l.b16 %v712
    %v848 = vunpack.c.l.b16 %v713
    %v849 = vunpack.c.l.b16 %v714
    %v850 = vunpack.c.l.b16 %v715
    %v851 = vunpack.c.l.b16 %v716
    %v852 = vunpack.c.l.b16 %v717
    %v853 = vunpack.c.l.b16 %v718
    %v854 = vunpack.c.l.b16 %v719
    %v855 = vunpack.c.l.b16 %v720
    %v856 = vunpack.c.l.b16 %v721
    %v857 = vunpack.c.l.b16 %v722
    %v858 = vunpack.c.l.b16 %v723
    %v859 = vunpack.c.l.b16 %v724
    %v860 = vunpack.c.l.b16 %v725
    %v861 = vunpack.c.l.b16 %v726
    %v862 = vpack.c.b16 %v799, %v798
    %v863 = vpack.c.b16 %v801, %v800
    %v864 = vpack.c.b16 %v803, %v802
    %v865 = vpack.c.b16 %v805, %v804
    %v866 = vpack.c.b16 %v807, %v806
    %v867 = vpack.c.b16 %v809, %v808
    %v868 = vpack.c.b16 %v811, %v810
    %v869 = vpack.c.b16 %v813, %v812
    %v870 = vpack.c.b16 %v815, %v814
    %v871 = vpack.c.b16 %v817, %v816
    %v872 = vpack.c.b16 %v819, %v818
    %v873 = vpack.c.b16 %v821, %v820
    %v874 = vpack.c.b16 %v823, %v822
    %v875 = vpack.c.b16 %v825, %v824
    %v876 = vpack.c.b16 %v827, %v826
    %v877 = vpack.c.b16 %v829, %v828
    %v878 = vpack.c.b16 %v831, %v830
    %v879 = vpack.c.b16 %v833, %v832
    %v880 = vpack.c.b16 %v835, %v834
    %v881 = vpack.c.b16 %v837, %v836
    %v882 = vpack.c.b16 %v839, %v838
    %v883 = vpack.c.b16 %v841, %v840
    %v884 = vpack.c.b16 %v843, %v842
    %v885 = vpack.c.b16 %v845, %v844
    %v886 = vpack.c.b16 %v847, %v846
    %v887 = vpack.c.b16 %v849, %v848
    %v888 = vpack.c.b16 %v851, %v850
    %v889 = vpack.c.b16 %v853, %v852
    %v890 = vpack.c.b16 %v855, %v854
    %v891 = vpack.c.b16 %v857, %v856
    %v892 = vpack.c.b16 %v859, %v858
    %v893 = vpack.c.b16 %v861, %v860
    %926 = vmatprep.subr.bf16.mxu0 0
    %927 = vmatpush1.bf16.msra.mxu0 %v862
    %928 = vmatprep.subr.bf16.mxu0 0
    %929 = vmatpush1.bf16.msra.mxu0 %v863
    %930 = vmatprep.subr.bf16.mxu0 0
    %931 = vmatpush1.bf16.msra.mxu0 %v864
    %932 = vmatprep.subr.bf16.mxu0 0
    %933 = vmatpush1.bf16.msra.mxu0 %v865
    %934 = vmatprep.subr.bf16.mxu0 0
    %935 = vmatpush1.bf16.msra.mxu0 %v866
    %936 = vmatprep.subr.bf16.mxu0 0
    %937 = vmatpush1.bf16.msra.mxu0 %v867
    %938 = vmatprep.subr.bf16.mxu0 0
    %939 = vmatpush1.bf16.msra.mxu0 %v868
    %940 = vmatprep.subr.bf16.mxu0 0
    %941 = vmatpush1.bf16.msra.mxu0 %v869
    %942 = vmatprep.subr.bf16.mxu0 0
    %943 = vmatpush1.bf16.msra.mxu0 %v870
    %944 = vmatprep.subr.bf16.mxu0 0
    %945 = vmatpush1.bf16.msra.mxu0 %v871
    %946 = vmatprep.subr.bf16.mxu0 0
    %947 = vmatpush1.bf16.msra.mxu0 %v872
    %948 = vmatprep.subr.bf16.mxu0 0
    %949 = vmatpush1.bf16.msra.mxu0 %v873
    %950 = vmatprep.subr.bf16.mxu0 0
    %951 = vmatpush1.bf16.msra.mxu0 %v874
    %952 = vmatprep.subr.bf16.mxu0 0
    %953 = vmatpush1.bf16.msra.mxu0 %v875
    %954 = vmatprep.subr.bf16.mxu0 0
    %955 = vmatpush1.bf16.msra.mxu0 %v876
    %956 = vmatprep.subr.bf16.mxu0 0
    %957 = vmatpush1.bf16.msra.mxu0 %v877
    %958 = vmatprep.mubr.bf16.mxu0 %v660
    %959 = vmatmul.mubr.bf16.gmra.mrb[0].mxu0 %v659
    %v960 = vpop.f32.mrb[0].mxu0
    %v961 = vadd.f32 %v732, %v960
    %v962 = vpop.f32.mrb[0].mxu0
    %v963 = vpop.f32.mrb[0].mxu0
    %v964 = vpop.f32.mrb[0].mxu0
    %965 = vdwg.mxu0
    %966 = vmatprep.subr.bf16.mxu0 0
    %967 = vmatpush1.bf16.msra.mxu0 %v878
    %968 = vmatprep.subr.bf16.mxu0 0
    %969 = vmatpush1.bf16.msra.mxu0 %v879
    %970 = vmatprep.subr.bf16.mxu0 0
    %971 = vmatpush1.bf16.msra.mxu0 %v880
    %972 = vmatprep.subr.bf16.mxu0 0
    %973 = vmatpush1.bf16.msra.mxu0 %v881
    %974 = vmatprep.subr.bf16.mxu0 0
    %975 = vmatpush1.bf16.msra.mxu0 %v882
    %976 = vmatprep.subr.bf16.mxu0 0
    %977 = vmatpush1.bf16.msra.mxu0 %v883
    %978 = vmatprep.subr.bf16.mxu0 0
    %979 = vmatpush1.bf16.msra.mxu0 %v884
    %980 = vmatprep.subr.bf16.mxu0 0
    %981 = vmatpush1.bf16.msra.mxu0 %v885
    %982 = vmatprep.subr.bf16.mxu0 0
    %983 = vmatpush1.bf16.msra.mxu0 %v886
    %984 = vmatprep.subr.bf16.mxu0 0
    %985 = vmatpush1.bf16.msra.mxu0 %v887
    %986 = vmatprep.subr.bf16.mxu0 0
    %987 = vmatpush1.bf16.msra.mxu0 %v888
    %988 = vmatprep.subr.bf16.mxu0 0
    %989 = vmatpush1.bf16.msra.mxu0 %v889
    %990 = vmatprep.subr.bf16.mxu0 0
    %991 = vmatpush1.bf16.msra.mxu0 %v890
    %992 = vmatprep.subr.bf16.mxu0 0
    %993 = vmatpush1.bf16.msra.mxu0 %v891
    %994 = vmatprep.subr.bf16.mxu0 0
    %995 = vmatpush1.bf16.msra.mxu0 %v892
    %996 = vmatprep.subr.bf16.mxu0 0
    %997 = vmatpush1.bf16.msra.mxu0 %v893
    %998 = vmatprep.mubr.bf16.mxu0 %v662
    %999 = vmatmul.mubr.bf16.gmra.mrb[0].mxu0 %v661
    %v1000 = vpop.f32.mrb[0].mxu0
    %v1001 = vadd.f32 %v961, %v1000
    %v1002 = vpop.f32.mrb[0].mxu0
    %v1003 = vpop.f32.mrb[0].mxu0
    %v1004 = vpop.f32.mrb[0].mxu0
    %1005 = vdwg.mxu0
    %v1006 = vtanh.pop %v1001
    %1007 = vst [vmem:[#allocation11] sm:$0xff] %v1006
    // Predicated region
    $region66: #{tpu_custom_call.1} parent=1 // pred_check
      _
    $region67: #{tpu_custom_call.1} parent=1 // pred_check_branch
      %1009 = sbr.rel (0) target = $region69
    $region68: #{tpu_custom_call.1} parent=1 // pred_region
      %s1011 = ssub.s32 128, 128
      %1012 = vsyncadd [#allocation4], %s1011
      %s1014 = sshll.u32 [#allocation11], 4
      %s1015 = int_to_ptr.vmem [resolvable:$true] %s1014
      %1017 = dma.vmem_to_hbm [thread:$0]  %s1015, 128, %s11, [#allocation4]
    $region69: #{tpu_custom_call.1} parent=1 // pred_fallthru
      _
    // Predicated region
    $region70: #{tpu_custom_call.1} parent=1 // pred_check
      _
    $region71: #{tpu_custom_call.1} parent=1 // pred_check_branch
      %1019 = sbr.rel (0) target = $region73
    $region72: #{tpu_custom_call.1} parent=1 // pred_region
      %1020 = dma.done [#allocation4], 128
    $region73: #{tpu_custom_call.1} parent=1 // pred_fallthru
      _
    %1021 = vsyncpa [#allocation3], 1
    %1022 = vsyncpa [#allocation6], 1
    %1023 = vsyncpa [#allocation9], 1
    %1024 = vsyncpa [#allocation4], 1

</llo_original>
